<compile_context>
chip_gen: v7x
topology: tpu7x:2x2x1
jax: 0.10.0
libtpu: 0.0.40
codegen_flags: <defaults>
</compile_context>

<pallas_src>
import functools

import jax
import jax.numpy as jnp
from jax import lax
from jax.experimental import pallas as pl
from jax.experimental.pallas import tpu as pltpu

LN_EPS = 1e-5  # torch.nn.LayerNorm default


def _round_up(x, m):
    return (x + m - 1) // m * m


def _tpu_generation():
    try:
        kind = jax.devices()[0].device_kind.lower()
    except Exception:
        return "unknown"
    for g in ("v7", "v6", "v5"):
        if g in kind:
            return g
    return "unknown"


# generation -> (row_tile, hidden_tile, vmem cap bytes)
_GEN_DEFAULTS = {
    "v5": (256, 512, 100 << 20),   # 128 MiB physical; 256 rows already past crossover
    "v6": (512, 512, 100 << 20),   # needs biggest tm (918 TF/s vs 1.4 TB/s crossover)
    "v7": (384, 512, 52 << 20),    # 64 MiB physical VMEM; leave compiler headroom
    "unknown": (256, 512, 48 << 20),
}


def _mlp_kernel(x_ref, g_ref, beta_ref, w1_ref, b1_ref, w2_ref, b2_ref, o_ref,
                xn_ref, acc_ref, *, use_residual: bool, gelu_approximate: bool):
    # x_ref:  (tm, D)        gamma/beta: (1, D)  f32
    # w1_ref: (D, th)        b1_ref:     (1, th) f32
    # w2_ref: (th, Dout)     b2_ref:     (1, Dout) f32
    # xn_ref: (tm, D) scratch (MXU dtype), acc_ref: (tm, Dout) f32 scratch
    h = pl.program_id(1)

    @pl.when(h == 0)
    def _init():
        # LayerNorm once per row tile (x block is grid-invariant over the h axis,
        # so it stays VMEM-resident); result cached in scratch for all h chunks.
        x = x_ref[...].astype(jnp.float32)
        mean = jnp.mean(x, axis=-1, keepdims=True)
        centered = x - mean
        var = jnp.mean(centered * centered, axis=-1, keepdims=True)
        xn = (centered * lax.rsqrt(var + LN_EPS)) * g_ref[...] + beta_ref[...]
        xn_ref[...] = xn.astype(xn_ref.dtype)
        if use_residual:
            acc_ref[...] = x          # residual folded into accumulator init
        else:
            acc_ref[...] = jnp.zeros_like(acc_ref)

    # fc1 chunk: (tm, D) x (D, th) -> f32, + bias, GELU.
    pre = jnp.dot(xn_ref[...], w1_ref[...], preferred_element_type=jnp.float32)
    pre = pre + b1_ref[...]
    if gelu_approximate:
        # tanh GELU -> EUP slot, essentially free alongside the matmuls.
        act = jax.nn.gelu(pre, approximate=True)
    else:
        # exact erf GELU (torch nn.GELU default) -> VALU polynomial.
        act = 0.5 * pre * (1.0 + lax.erf(pre * jnp.float32(0.7071067811865476)))

    # fc2 chunk accumulate: (tm, th) x (th, Dout) -> (tm, Dout) f32 accumulator.
    acc_ref[...] += jnp.dot(act.astype(w2_ref.dtype), w2_ref[...],
                            preferred_element_type=jnp.float32)

    @pl.when(h == pl.num_programs(1) - 1)
    def _finalize():
        o_ref[...] = (acc_ref[...] + b2_ref[...]).astype(o_ref.dtype)


def mlp_pallas(x, params, *, use_residual=True, row_tile=None, hidden_tile=None,
               mxu_dtype=None, gelu_approximate=False, weight_buffers=2,
               row_dim_semantics=None):
    """x: (..., in_dim). params: dict of gamma, beta, w1, b1, w2, b2.

    row_tile / hidden_tile default to generation-aware values.
    mxu_dtype: matmul operand dtype; None -> bf16 when weights are f32 (fast path).
    gelu_approximate: tanh GELU fast path (torch default is exact erf -> False).
    weight_buffers: pipeline depth for the streamed weight chunks (2 default; 3 can
      help v5e when weight DMA is exposed and VMEM allows).
    row_dim_semantics: override the row grid axis semantics (e.g. pltpu.CORE_PARALLEL
      on v7x when n_rows/tm >= 2); default "parallel".
    """
    gen = _tpu_generation()
    def_row, def_hid, vmem_cap = _GEN_DEFAULTS[gen]
    if row_tile is None:
        row_tile = def_row
    if hidden_tile is None:
        hidden_tile = def_hid
    hidden_tile = max(128, _round_up(hidden_tile, 128))
    if row_dim_semantics is None:
        row_dim_semantics = "parallel"
        # TODO(synk): switch to pltpu.CORE_PARALLEL on v7x once verified that both
        # TCs receive row tiles for the target grid sizes.

    in_dim = x.shape[-1]
    hidden_dim = params["w1"].shape[1]
    out_dim = params["w2"].shape[1]
    if use_residual:
        assert in_dim == out_dim

    # MXU operand dtype: bf16 when weights arrive as f32 (2-4x MXU throughput and
    # half the weight HBM traffic); accumulation stays f32 either way.
    w1 = params["w1"]
    w2 = params["w2"]
    if mxu_dtype is None:
        mxu_dtype = jnp.bfloat16 if w1.dtype == jnp.float32 else w1.dtype
    mxu_dtype = jnp.dtype(mxu_dtype)
    w1 = w1.astype(mxu_dtype)
    w2 = w2.astype(mxu_dtype)

    orig_shape = x.shape
    x2 = x.reshape(-1, in_dim)
    n_rows = x2.shape[0]

    # Row tile: large to amortize weight re-streaming per row tile; multiple of 8.
    tm = min(_round_up(row_tile, 8), _round_up(n_rows, 8))

    # Hidden chunk: full dim (legal block regardless of 128) or a multiple of 128.
    if hidden_dim <= hidden_tile:
        th = hidden_dim
    else:
        th = hidden_tile

    def vmem_est(tm_, th_):
        wb = mxu_dtype.itemsize
        xb = x2.dtype.itemsize
        return (2 * tm_ * in_dim * xb                                   # x dbl-buffer
                + weight_buffers * (in_dim * th_ + th_ * out_dim) * wb  # weight chunks
                + weight_buffers * th_ * 4                              # b1 chunk
                + 2 * (out_dim + 2 * in_dim) * 4                        # b2/gamma/beta
                + 2 * tm_ * out_dim * xb                                # out dbl-buffer
                + tm_ * in_dim * mxu_dtype.itemsize                     # xn scratch
                + tm_ * out_dim * 4)                                    # f32 accumulator

    # If over budget: shrink the hidden chunk first (doesn't change total weight DMA
    # per row tile), only then the row tile (which does hurt arithmetic intensity).
    while vmem_est(tm, th) > vmem_cap and th < hidden_dim and th > 128:
        th = max(128, (th // 2) // 128 * 128)
    while vmem_est(tm, th) > vmem_cap and tm > 64:
        tm = max(64, _round_up(tm // 2, 8))

    # Pad rows up to the row tile.
    n_rows_p = _round_up(n_rows, tm)
    if n_rows_p != n_rows:
        x2 = jnp.pad(x2, ((0, n_rows_p - n_rows), (0, 0)))

    # Pad hidden so th divides evenly; padded w1 cols / w2 rows / b1 are zero and
    # contribute nothing (GELU(0 + 0) * 0 rows of w2 => exact only because b1 pad is 0
    # and the padded w2 rows are 0 regardless of the activation value).
    h_pad = _round_up(hidden_dim, th) if th < hidden_dim else hidden_dim
    b1 = params["b1"].astype(jnp.float32).reshape(1, hidden_dim)
    if h_pad != hidden_dim:
        w1 = jnp.pad(w1, ((0, 0), (0, h_pad - hidden_dim)))
        w2 = jnp.pad(w2, ((0, h_pad - hidden_dim), (0, 0)))
        b1 = jnp.pad(b1, ((0, 0), (0, h_pad - hidden_dim)))

    g = params["gamma"].astype(jnp.float32).reshape(1, in_dim)
    beta = params["beta"].astype(jnp.float32).reshape(1, in_dim)
    b2 = params["b2"].astype(jnp.float32).reshape(1, out_dim)

    grid = (n_rows_p // tm, h_pad // th)

    est = vmem_est(tm, th)
    vmem_limit = int(min(max(int(1.5 * est), 32 << 20), vmem_cap))

    kernel = functools.partial(_mlp_kernel, use_residual=use_residual,
                               gelu_approximate=gelu_approximate)

    wkw = {} if weight_buffers == 2 else {"pipeline_mode": pl.Buffered(weight_buffers)}

    out2 = pl.pallas_call(
        kernel,
        out_shape=jax.ShapeDtypeStruct((n_rows_p, out_dim), x.dtype),
        grid_spec=pltpu.PrefetchScalarGridSpec(
            num_scalar_prefetch=0,
            grid=grid,
            in_specs=[
                pl.BlockSpec((tm, in_dim), lambda i, h: (i, 0)),            # x rows
                pl.BlockSpec((1, in_dim), lambda i, h: (0, 0)),             # gamma f32
                pl.BlockSpec((1, in_dim), lambda i, h: (0, 0)),             # beta  f32
                pl.BlockSpec((in_dim, th), lambda i, h: (0, h), **wkw),     # w1 chunk
                pl.BlockSpec((1, th), lambda i, h: (0, h)),                 # b1 chunk
                pl.BlockSpec((th, out_dim), lambda i, h: (h, 0), **wkw),    # w2 chunk
                pl.BlockSpec((1, out_dim), lambda i, h: (0, 0)),            # b2 f32
            ],
            out_specs=pl.BlockSpec((tm, out_dim), lambda i, h: (i, 0)),
            scratch_shapes=[
                pltpu.VMEM((tm, in_dim), mxu_dtype),    # cached LayerNorm output
                pltpu.VMEM((tm, out_dim), jnp.float32),  # fc2 accumulator (+ residual)
            ],
        ),
        compiler_params=pltpu.CompilerParams(
            dimension_semantics=(row_dim_semantics, "arbitrary"),
            vmem_limit_bytes=vmem_limit,
        ),
    )(x2, g, beta, w1, b1, w2, b2)

    if n_rows_p != n_rows:
        out2 = out2[:n_rows]
    return out2.reshape(orig_shape[:-1] + (out_dim,))


def init_mlp_params(key, in_dim, hidden_dim, out_dim, dtype=jnp.float32):
    k1, k2, k3, k4 = jax.random.split(key, 4)
    # torch.nn.Linear init: U(-1/sqrt(fan_in), 1/sqrt(fan_in)); layernorm: ones/zeros.
    s1 = 1.0 / jnp.sqrt(in_dim)
    s2 = 1.0 / jnp.sqrt(hidden_dim)
    return {
        "gamma": jnp.ones((in_dim,), dtype),
        "beta": jnp.zeros((in_dim,), dtype),
        "w1": jax.random.uniform(k1, (in_dim, hidden_dim), dtype, -s1, s1),
        "b1": jax.random.uniform(k2, (hidden_dim,), dtype, -s1, s1),
        "w2": jax.random.uniform(k3, (hidden_dim, out_dim), dtype, -s2, s2),
        "b2": jax.random.uniform(k4, (out_dim,), dtype, -s2, s2),
    }


def mlp_reference(x, params, use_residual=True):
    g, b = params["gamma"], params["beta"]
    mean = jnp.mean(x, axis=-1, keepdims=True)
    var = jnp.mean((x - mean) ** 2, axis=-1, keepdims=True)
    xn = (x - mean) / jnp.sqrt(var + LN_EPS) * g + b
    h = xn @ params["w1"] + params["b1"]
    h = jax.nn.gelu(h, approximate=False)
    y = h @ params["w2"] + params["b2"]
    if use_residual:
        y = y + x
    return y


if __name__ == "__main__":
    batch, seq, in_dim, hidden_dim = 2, 8, 32, 64
    out_dim = in_dim  # use_residual=True requires in_dim == out_dim

    key = jax.random.PRNGKey(0)
    kx, kp = jax.random.split(key)
    x = jax.random.normal(kx, (batch, seq, in_dim), jnp.float32)
    params = init_mlp_params(kp, in_dim, hidden_dim, out_dim)
    ref = mlp_reference(x, params, use_residual=True)

    # Exact path (f32 MXU operands, exact erf GELU) — matches the torch module.
    out = jax.block_until_ready(
        mlp_pallas(x, params, use_residual=True, mxu_dtype=jnp.float32))
    assert out.shape == (batch, seq, out_dim)
    assert jnp.allclose(out, ref, atol=1e-4, rtol=1e-4), "mismatch vs reference (f32)"

    # Default fast path: f32 weights auto-cast to bf16 MXU operands, f32 accumulation.
    out_fast = jax.block_until_ready(mlp_pallas(x, params, use_residual=True))
    assert jnp.allclose(out_fast, ref, atol=5e-2, rtol=5e-2), "mismatch (bf16 path)"

    # Hidden-dim chunking + row-padding path with lane-legal tiles (th = 128 chunk of
    # a 256-wide hidden dim, odd row count padded up to the row tile).
    hid2 = 256
    params2 = init_mlp_params(kp, in_dim, hid2, out_dim)
    x_b = jax.random.normal(kx, (3, 7, in_dim), jnp.float32)
    out_b = jax.block_until_ready(
        mlp_pallas(x_b, params2, use_residual=True, row_tile=16, hidden_tile=128,
                   mxu_dtype=jnp.float32))
    ref_b = mlp_reference(x_b, params2, use_residual=True)
    assert jnp.allclose(out_b, ref_b, atol=1e-4, rtol=1e-4), "mismatch (chunked path)"

    print("KERNEL_OK")
</pallas_src>

<mosaic_0001>
module attributes {stable_mosaic.version = 11 : i64} {
  func.func @_mlp_kernel(%arg0: i32, %arg1: i32, %arg2: memref<16x32xf32, #tpu.memory_space<vmem>>, %arg3: memref<1x32xf32, #tpu.memory_space<vmem>>, %arg4: memref<1x32xf32, #tpu.memory_space<vmem>>, %arg5: memref<32x64xf32, #tpu.memory_space<vmem>>, %arg6: memref<1x64xf32, #tpu.memory_space<vmem>>, %arg7: memref<64x32xf32, #tpu.memory_space<vmem>>, %arg8: memref<1x32xf32, #tpu.memory_space<vmem>>, %arg9: memref<16x32xf32, #tpu.memory_space<vmem>>, %arg10: memref<16x32xf32, #tpu.memory_space<vmem>>, %arg11: memref<16x32xf32, #tpu.memory_space<vmem>>) attributes {dimension_semantics = [#tpu.dimension_semantics<parallel>, #tpu.dimension_semantics<arbitrary>], iteration_bounds = array<i64: 1, 1>, scalar_prefetch = 0 : i64, scratch_operands = 2 : i64, tpu.core_type = #tpu.core_type<tc>, window_params = [{transform_indices = @transform_0, window_bounds = array<i64: 16, 32>}, {pipeline_mode = #tpu.pipeline_mode<synchronous>, transform_indices = @transform_1, window_bounds = array<i64: 1, 32>}, {pipeline_mode = #tpu.pipeline_mode<synchronous>, transform_indices = @transform_2, window_bounds = array<i64: 1, 32>}, {transform_indices = @transform_3, window_bounds = array<i64: 32, 64>}, {transform_indices = @transform_4, window_bounds = array<i64: 1, 64>}, {transform_indices = @transform_5, window_bounds = array<i64: 64, 32>}, {pipeline_mode = #tpu.pipeline_mode<synchronous>, transform_indices = @transform_6, window_bounds = array<i64: 1, 32>}, {transform_indices = @transform_7, window_bounds = array<i64: 16, 32>}]} {
    %c0_i32 = arith.constant 0 : i32
    %0 = arith.cmpi eq, %arg1, %c0_i32 : i32
    %1 = arith.extui %0 : i1 to i32
    %c0_i32_0 = arith.constant 0 : i32
    %2 = arith.cmpi ne, %1, %c0_i32_0 : i32
    scf.if %2 {
      %c0_18 = arith.constant 0 : index
      %c0_19 = arith.constant 0 : index
      %25 = vector.load %arg2[%c0_18, %c0_19] : memref<16x32xf32, #tpu.memory_space<vmem>>, vector<16x32xf32>
      %cst_20 = arith.constant dense<0.000000e+00> : vector<16xf32>
      %26 = vector.multi_reduction <add>, %25, %cst_20 [1] : vector<16x32xf32> to vector<16xf32>
      %27 = vector.shape_cast %26 : vector<16xf32> to vector<16x1xf32>
      %cst_21 = arith.constant 3.200000e+01 : f32
      %28 = vector.broadcast %cst_21 : f32 to vector<16x1xf32>
      %29 = arith.divf %27, %28 : vector<16x1xf32>
      %30 = vector.broadcast %29 : vector<16x1xf32> to vector<16x32xf32>
      %31 = arith.subf %25, %30 : vector<16x32xf32>
      %32 = arith.mulf %31, %31 : vector<16x32xf32>
      %cst_22 = arith.constant dense<0.000000e+00> : vector<16xf32>
      %33 = vector.multi_reduction <add>, %32, %cst_22 [1] : vector<16x32xf32> to vector<16xf32>
      %34 = vector.shape_cast %33 : vector<16xf32> to vector<16x1xf32>
      %cst_23 = arith.constant 3.200000e+01 : f32
      %35 = vector.broadcast %cst_23 : f32 to vector<16x1xf32>
      %36 = arith.divf %34, %35 : vector<16x1xf32>
      %cst_24 = arith.constant 9.99999974E-6 : f32
      %37 = vector.broadcast %cst_24 : f32 to vector<16x1xf32>
      %38 = arith.addf %36, %37 : vector<16x1xf32>
      %39 = math.rsqrt %38 : vector<16x1xf32>
      %40 = vector.broadcast %39 : vector<16x1xf32> to vector<16x32xf32>
      %41 = arith.mulf %31, %40 : vector<16x32xf32>
      %c0_25 = arith.constant 0 : index
      %c0_26 = arith.constant 0 : index
      %42 = vector.load %arg3[%c0_25, %c0_26] : memref<1x32xf32, #tpu.memory_space<vmem>>, vector<1x32xf32>
      %43 = vector.broadcast %42 : vector<1x32xf32> to vector<16x32xf32>
      %44 = arith.mulf %41, %43 : vector<16x32xf32>
      %c0_27 = arith.constant 0 : index
      %c0_28 = arith.constant 0 : index
      %45 = vector.load %arg4[%c0_27, %c0_28] : memref<1x32xf32, #tpu.memory_space<vmem>>, vector<1x32xf32>
      %46 = vector.broadcast %45 : vector<1x32xf32> to vector<16x32xf32>
      %47 = arith.addf %44, %46 : vector<16x32xf32>
      %c0_29 = arith.constant 0 : index
      %c0_30 = arith.constant 0 : index
      %48 = vector.load %arg10[%c0_29, %c0_30] : memref<16x32xf32, #tpu.memory_space<vmem>>, vector<16x32xf32>
      tpu.vector_store %arg10[%c0_29, %c0_30], %47 {strides = array<i32>} : memref<16x32xf32, #tpu.memory_space<vmem>>, vector<16x32xf32>,
      %c0_31 = arith.constant 0 : index
      %c0_32 = arith.constant 0 : index
      %49 = vector.load %arg11[%c0_31, %c0_32] : memref<16x32xf32, #tpu.memory_space<vmem>>, vector<16x32xf32>
      tpu.vector_store %arg11[%c0_31, %c0_32], %25 {strides = array<i32>} : memref<16x32xf32, #tpu.memory_space<vmem>>, vector<16x32xf32>,
    } else {
    }
    %c0 = arith.constant 0 : index
    %c0_1 = arith.constant 0 : index
    %3 = vector.load %arg10[%c0, %c0_1] : memref<16x32xf32, #tpu.memory_space<vmem>>, vector<16x32xf32>
    %c0_2 = arith.constant 0 : index
    %c0_3 = arith.constant 0 : index
    %4 = vector.load %arg5[%c0_2, %c0_3] : memref<32x64xf32, #tpu.memory_space<vmem>>, vector<32x64xf32>
    %cst = arith.constant dense<0.000000e+00> : vector<16x64xf32>
    %5 = tpu.matmul %3, %4, %cst {dimension_numbers = #tpu.dot_dimension_numbers<[1], [0], [0], [1], [0, 0, 1, 1], [], []>} : vector<16x32xf32>, vector<32x64xf32>, vector<16x64xf32> -> vector<16x64xf32>
    %c0_4 = arith.constant 0 : index
    %c0_5 = arith.constant 0 : index
    %6 = vector.load %arg6[%c0_4, %c0_5] : memref<1x64xf32, #tpu.memory_space<vmem>>, vector<1x64xf32>
    %7 = vector.broadcast %6 : vector<1x64xf32> to vector<16x64xf32>
    %8 = arith.addf %5, %7 : vector<16x64xf32>
    %cst_6 = arith.constant 5.000000e-01 : f32
    %9 = vector.broadcast %cst_6 : f32 to vector<16x64xf32>
    %10 = arith.mulf %9, %8 : vector<16x64xf32>
    %cst_7 = arith.constant 0.707106769 : f32
    %11 = vector.broadcast %cst_7 : f32 to vector<16x64xf32>
    %12 = arith.mulf %8, %11 : vector<16x64xf32>
    %13 = math.erf %12 : vector<16x64xf32>
    %cst_8 = arith.constant 1.000000e+00 : f32
    %14 = vector.broadcast %cst_8 : f32 to vector<16x64xf32>
    %15 = arith.addf %14, %13 : vector<16x64xf32>
    %16 = arith.mulf %10, %15 : vector<16x64xf32>
    %c0_9 = arith.constant 0 : index
    %c0_10 = arith.constant 0 : index
    %17 = vector.load %arg11[%c0_9, %c0_10] : memref<16x32xf32, #tpu.memory_space<vmem>>, vector<16x32xf32>
    %c0_11 = arith.constant 0 : index
    %c0_12 = arith.constant 0 : index
    %18 = vector.load %arg7[%c0_11, %c0_12] : memref<64x32xf32, #tpu.memory_space<vmem>>, vector<64x32xf32>
    %cst_13 = arith.constant dense<0.000000e+00> : vector<16x32xf32>
    %19 = tpu.matmul %16, %18, %cst_13 {dimension_numbers = #tpu.dot_dimension_numbers<[1], [0], [0], [1], [0, 0, 1, 1], [], []>} : vector<16x64xf32>, vector<64x32xf32>, vector<16x32xf32> -> vector<16x32xf32>
    %20 = arith.addf %17, %19 : vector<16x32xf32>
    %c0_14 = arith.constant 0 : index
    %c0_15 = arith.constant 0 : index
    %21 = vector.load %arg11[%c0_14, %c0_15] : memref<16x32xf32, #tpu.memory_space<vmem>>, vector<16x32xf32>
    tpu.vector_store %arg11[%c0_14, %c0_15], %20 {strides = array<i32>} : memref<16x32xf32, #tpu.memory_space<vmem>>, vector<16x32xf32>,
    %c0_i32_16 = arith.constant 0 : i32
    %22 = arith.cmpi eq, %arg1, %c0_i32_16 : i32
    %23 = arith.extui %22 : i1 to i32
    %c0_i32_17 = arith.constant 0 : i32
    %24 = arith.cmpi ne, %23, %c0_i32_17 : i32
    scf.if %24 {
      %c0_18 = arith.constant 0 : index
      %c0_19 = arith.constant 0 : index
      %25 = vector.load %arg11[%c0_18, %c0_19] : memref<16x32xf32, #tpu.memory_space<vmem>>, vector<16x32xf32>
      %c0_20 = arith.constant 0 : index
      %c0_21 = arith.constant 0 : index
      %26 = vector.load %arg8[%c0_20, %c0_21] : memref<1x32xf32, #tpu.memory_space<vmem>>, vector<1x32xf32>
      %27 = vector.broadcast %26 : vector<1x32xf32> to vector<16x32xf32>
      %28 = arith.addf %25, %27 : vector<16x32xf32>
      %c0_22 = arith.constant 0 : index
      %c0_23 = arith.constant 0 : index
      %29 = vector.load %arg9[%c0_22, %c0_23] : memref<16x32xf32, #tpu.memory_space<vmem>>, vector<16x32xf32>
      tpu.vector_store %arg9[%c0_22, %c0_23], %28 {strides = array<i32>} : memref<16x32xf32, #tpu.memory_space<vmem>>, vector<16x32xf32>,
    } else {
    }
    return
  }
  func.func @transform_0(%arg0: i32, %arg1: i32) -> (i32, i32) {
    %c0_i32 = arith.constant 0 : i32
    %c0_i32_0 = arith.constant 0 : i32
    return %arg0, %c0_i32 : i32, i32
  }
  func.func @transform_1(%arg0: i32, %arg1: i32) -> (i32, i32) {
    %c0_i32 = arith.constant 0 : i32
    %c0_i32_0 = arith.constant 0 : i32
    %c0_i32_1 = arith.constant 0 : i32
    return %c0_i32, %c0_i32_0 : i32, i32
  }
  func.func @transform_2(%arg0: i32, %arg1: i32) -> (i32, i32) {
    %c0_i32 = arith.constant 0 : i32
    %c0_i32_0 = arith.constant 0 : i32
    %c0_i32_1 = arith.constant 0 : i32
    return %c0_i32, %c0_i32_0 : i32, i32
  }
  func.func @transform_3(%arg0: i32, %arg1: i32) -> (i32, i32) {
    %c0_i32 = arith.constant 0 : i32
    %c0_i32_0 = arith.constant 0 : i32
    return %c0_i32, %arg1 : i32, i32
  }
  func.func @transform_4(%arg0: i32, %arg1: i32) -> (i32, i32) {
    %c0_i32 = arith.constant 0 : i32
    %c0_i32_0 = arith.constant 0 : i32
    return %c0_i32, %arg1 : i32, i32
  }
  func.func @transform_5(%arg0: i32, %arg1: i32) -> (i32, i32) {
    %c0_i32 = arith.constant 0 : i32
    %c0_i32_0 = arith.constant 0 : i32
    return %arg1, %c0_i32 : i32, i32
  }
  func.func @transform_6(%arg0: i32, %arg1: i32) -> (i32, i32) {
    %c0_i32 = arith.constant 0 : i32
    %c0_i32_0 = arith.constant 0 : i32
    %c0_i32_1 = arith.constant 0 : i32
    return %c0_i32, %c0_i32_0 : i32, i32
  }
  func.func @transform_7(%arg0: i32, %arg1: i32) -> (i32, i32) {
    %c0_i32 = arith.constant 0 : i32
    %c0_i32_0 = arith.constant 0 : i32
    return %arg0, %c0_i32 : i32, i32
  }
}

</mosaic_0001>

<llo_original>
// kernel: tpu_custom_call.1
$region0: #{tpu_custom_call.1}
  #allocation0 [shape = 'u32[]', space=smem, size = 0x4, offset = 0x4, fixed_abs, tag = 'smem constant byte address 0x4 - core index']
  #allocation1 [shape = 'u32[144,128]{1,0:T(1,128)}', space=vmem, size = 0x12000, scoped, tag = 'internal scratch']
  #allocation2 [shape = 'f32[16,32]{1,0:T(8,128)}', space=vmem, size = 0x2000, scoped, tag = 'scratch operand']
  #allocation3 [shape = 'f32[16,32]{1,0:T(8,128)}', space=vmem, size = 0x2000, scoped, tag = 'scratch operand']
  %s0 = inlined_call_operand.vmem [shape: f32[16,32], index: 0, kind: input, shape index: {}]
  %s1 = inlined_call_operand.vmem [shape: f32[1,32], index: 1, kind: input, shape index: {}]
  %s2 = inlined_call_operand.vmem [shape: f32[1,32], index: 2, kind: input, shape index: {}]
  %s3 = inlined_call_operand.vmem [shape: f32[32,64], index: 3, kind: input, shape index: {}]
  %s4 = inlined_call_operand.vmem [shape: f32[1,64], index: 4, kind: input, shape index: {}]
  %s5 = inlined_call_operand.vmem [shape: f32[64,32], index: 5, kind: input, shape index: {}]
  %s6 = inlined_call_operand.vmem [shape: f32[1,32], index: 6, kind: input, shape index: {}]
  %s7 = inlined_call_operand.hbm [shape: f32[16,32], index: 7, kind: output, shape index: {}]
  %s8 = sld [smem:[#allocation0]]
  $region46: #{tpu_custom_call.1} parent=0
    _
  %s10 = ssub.s32 1, %s8
  %s11 = scalar_select 0, %s10, %s8
  $region1: #{tpu_custom_call.1} parent=0
    #allocation4 [shape = 'u8[8192]{0}', space=vmem, size = 0x2000, scoped, tag = 'output window, operand 0, single buffered']
    #allocation5 [shape = 's32[1]{0}', space=sflag, size = 0x4, scoped, tag = 'scoped memory for tpu_custom_call.1']
    %12 = vsyncpa [#allocation5], 0
    // Predicated region
    $region2: #{tpu_custom_call.1} parent=1 // pred_check
      _
    $region3: #{tpu_custom_call.1} parent=1 // pred_check_branch
      %14 = sbr.rel (0) target = $region5
    $region4: #{tpu_custom_call.1} parent=1 // pred_region
      _
    $region5: #{tpu_custom_call.1} parent=1 // pred_fallthru
      _
    // Predicated region
    $region6: #{tpu_custom_call.1} parent=1 // pred_check
      _
    $region7: #{tpu_custom_call.1} parent=1 // pred_check_branch
      %16 = sbr.rel (0) target = $region9
    $region8: #{tpu_custom_call.1} parent=1 // pred_region
      _
    $region9: #{tpu_custom_call.1} parent=1 // pred_fallthru
      _
    // Predicated region
    $region10: #{tpu_custom_call.1} parent=1 // pred_check
      _
    $region11: #{tpu_custom_call.1} parent=1 // pred_check_branch
      %18 = sbr.rel (0) target = $region13
    $region12: #{tpu_custom_call.1} parent=1 // pred_region
      _
    $region13: #{tpu_custom_call.1} parent=1 // pred_fallthru
      _
    // Predicated region
    $region14: #{tpu_custom_call.1} parent=1 // pred_check
      _
    $region15: #{tpu_custom_call.1} parent=1 // pred_check_branch
      %20 = sbr.rel (0) target = $region17
    $region16: #{tpu_custom_call.1} parent=1 // pred_region
      _
    $region17: #{tpu_custom_call.1} parent=1 // pred_fallthru
      _
    // Predicated region
    $region18: #{tpu_custom_call.1} parent=1 // pred_check
      _
    $region19: #{tpu_custom_call.1} parent=1 // pred_check_branch
      %22 = sbr.rel (0) target = $region21
    $region20: #{tpu_custom_call.1} parent=1 // pred_region
      _
    $region21: #{tpu_custom_call.1} parent=1 // pred_fallthru
      _
    // Predicated region
    $region22: #{tpu_custom_call.1} parent=1 // pred_check
      _
    $region23: #{tpu_custom_call.1} parent=1 // pred_check_branch
      %24 = sbr.rel (0) target = $region25
    $region24: #{tpu_custom_call.1} parent=1 // pred_region
      _
    $region25: #{tpu_custom_call.1} parent=1 // pred_fallthru
      _
    // Predicated region
    $region26: #{tpu_custom_call.1} parent=1 // pred_check
      _
    $region27: #{tpu_custom_call.1} parent=1 // pred_check_branch
      %26 = sbr.rel (0) target = $region29
    $region28: #{tpu_custom_call.1} parent=1 // pred_region
      _
    $region29: #{tpu_custom_call.1} parent=1 // pred_fallthru
      _
    %p27 = scmp.eq.s32.totalorder 0, 0
    // Predicated region
    $region30: #{tpu_custom_call.1} parent=1 // pred_check
      %p28 = pneg %p27
    $region31: #{tpu_custom_call.1} parent=1 // pred_check_branch
      %30 = sbr.rel (%p28) target = $region33
    $region32: #{tpu_custom_call.1} parent=1 // pred_region
      %v31 = vld [vmem:[%s0] sm:$0xff]
      %v32 = vld [vmem:[%s0 + $0x8] sm:$0xff]
      %vm33 = vcmask 261120
      %v34 = vsel %vm33, %v31, 0.0
      %35 = vadd.xlane.f32.xlu0 %v34
      %v36 = vpop.xlane.xlu0 %35
      %v37 = vsel %vm33, %v32, 0.0
      %38 = vadd.xlane.f32.xlu0 %v37
      %v39 = vpop.xlane.xlu0 %38
      %v40 = vrcp.pop 32.0
      %v41 = vmul.f32 %v36, %v40
      %v42 = vmul.f32 %v39, %v40
      %v43 = vsub.f32 %v31, %v41
      %v44 = vsub.f32 %v32, %v42
      %v45 = vmul.f32 %v43, %v43
      %v46 = vmul.f32 %v44, %v44
      %v47 = vsel %vm33, %v45, 0.0
      %48 = vadd.xlane.f32.xlu0 %v47
      %v49 = vpop.xlane.xlu0 %48
      %v50 = vsel %vm33, %v46, 0.0
      %51 = vadd.xlane.f32.xlu0 %v50
      %v52 = vpop.xlane.xlu0 %51
      %v53 = vmul.f32 %v49, %v40
      %v54 = vmul.f32 %v52, %v40
      %v55 = vadd.f32 %v53, 1e-05
      %v56 = vadd.f32 %v54, 1e-05
      %v57 = vrsqrt.pop %v55
      %v58 = vrsqrt.pop %v56
      %v59 = vmul.f32 %v43, %v57
      %v60 = vmul.f32 %v44, %v58
      %v61 = vld [vmem:[%s1] sm:$0x1]
      %v63 = vlaneseq
      %v64 = vshrl.u32 %v63, 7
      %v65 = vsub.s32 0, %v64
      %v66 = vrot.slane %v61, %v65
      %v68 = vmul.f32 %v59, %v66
      %v69 = vmul.f32 %v60, %v66
      %v70 = vld [vmem:[%s2] sm:$0x1]
      %v72 = vlaneseq
      %v73 = vshrl.u32 %v72, 7
      %v74 = vsub.s32 0, %v73
      %v75 = vrot.slane %v70, %v74
      %v77 = vadd.f32 %v68, %v75
      %v78 = vadd.f32 %v69, %v75
      %79 = vst.msk [vmem:[#allocation2] sm:$0xff] %vm33, %v77
      %80 = vst.msk [vmem:[#allocation2 + $0x8] sm:$0xff] %vm33, %v78
      %81 = vst.msk [vmem:[#allocation3] sm:$0xff] %vm33, %v31
      %82 = vst.msk [vmem:[#allocation3 + $0x8] sm:$0xff] %vm33, %v32
    $region33: #{tpu_custom_call.1} parent=1 // pred_fallthru
      _
    %v83 = vld [vmem:[#allocation2] sm:$0xff]
    %v84 = vld [vmem:[#allocation2 + $0x8] sm:$0xff]
    %v85 = vld [vmem:[%s3] sm:$0xff]
    %v86 = vld [vmem:[%s3 + $0x8] sm:$0xff]
    %v87 = vld [vmem:[%s3 + $0x10] sm:$0xff]
    %v88 = vld [vmem:[%s3 + $0x18] sm:$0xff]
    %v89 = vld [vmem:[%s4] sm:$0x1]
    %v91 = vlaneseq
    %v92 = vshrl.u32 %v91, 7
    %v93 = vsub.s32 0, %v92
    %v94 = vrot.slane %v89, %v93
    %vm96 = vcmask 261120
    %v98 = vsel %vm96, %v83, 0
    %v101 = vsel %vm96, %v84, 0
    %103 = vmatprep.subr.mxu0 0.0
    %104 = vmatpush1.msra.mxu0 %v85
    %105 = vmatprep.subr.mxu0 0.0
    %106 = vmatpush1.msra.mxu0 %v86
    %107 = vmatprep.subr.mxu0 0.0
    %108 = vmatpush1.msra.mxu0 %v87
    %109 = vmatprep.subr.mxu0 0.0
    %110 = vmatpush1.msra.mxu0 %v88
    %111 = vmatprep.subr.mxu0 0.0
    %112 = vmatpush1.msra.mxu0 0.0
    %113 = vmatprep.subr.mxu0 0.0
    %114 = vmatpush1.msra.mxu0 0.0
    %115 = vmatprep.subr.mxu0 0.0
    %116 = vmatpush1.msra.mxu0 0.0
    %117 = vmatprep.subr.mxu0 0.0
    %118 = vmatpush1.msra.mxu0 0.0
    %119 = vmatprep.subr.mxu0 0.0
    %120 = vmatpush1.msra.mxu0 0.0
    %121 = vmatprep.subr.mxu0 0.0
    %122 = vmatpush1.msra.mxu0 0.0
    %123 = vmatprep.subr.mxu0 0.0
    %124 = vmatpush1.msra.mxu0 0.0
    %125 = vmatprep.subr.mxu0 0.0
    %126 = vmatpush1.msra.mxu0 0.0
    %127 = vmatprep.subr.mxu0 0.0
    %128 = vmatpush1.msra.mxu0 0.0
    %129 = vmatprep.subr.mxu0 0.0
    %130 = vmatpush1.msra.mxu0 0.0
    %131 = vmatprep.subr.mxu0 0.0
    %132 = vmatpush1.msra.mxu0 0.0
    %133 = vmatprep.subr.mxu0 0.0
    %134 = vmatpush1.msra.mxu0 0.0
    %135 = vmatprep.subr.mxu0 0.0
    %136 = vmatpush1.msra.mxu0 0.0
    %137 = vmatprep.subr.mxu0 0.0
    %138 = vmatpush1.msra.mxu0 0.0
    %139 = vmatprep.subr.mxu0 0.0
    %140 = vmatpush1.msra.mxu0 0.0
    %141 = vmatprep.subr.mxu0 0.0
    %142 = vmatpush1.msra.mxu0 0.0
    %143 = vmatprep.subr.mxu0 0.0
    %144 = vmatpush1.msra.mxu0 0.0
    %145 = vmatprep.subr.mxu0 0.0
    %146 = vmatpush1.msra.mxu0 0.0
    %147 = vmatprep.subr.mxu0 0.0
    %148 = vmatpush1.msra.mxu0 0.0
    %149 = vmatprep.subr.mxu0 0.0
    %150 = vmatpush1.msra.mxu0 0.0
    %151 = vmatprep.subr.mxu0 0.0
    %152 = vmatpush1.msra.mxu0 0.0
    %153 = vmatprep.subr.mxu0 0.0
    %154 = vmatpush1.msra.mxu0 0.0
    %155 = vmatprep.subr.mxu0 0.0
    %156 = vmatpush1.msra.mxu0 0.0
    %157 = vmatprep.subr.mxu0 0.0
    %158 = vmatpush1.msra.mxu0 0.0
    %159 = vmatprep.subr.mxu0 0.0
    %160 = vmatpush1.msra.mxu0 0.0
    %161 = vmatprep.subr.mxu0 0.0
    %162 = vmatpush1.msra.mxu0 0.0
    %163 = vmatprep.subr.mxu0 0.0
    %164 = vmatpush1.msra.mxu0 0.0
    %165 = vmatprep.subr.mxu0 0.0
    %166 = vmatpush1.msra.mxu0 0.0
    %167 = vmatprep.mubr.f32.mxu0 0.0
    %168 = vmatmul.mubr.f32.gmra.mrb[0].mxu0 %v98
    %v169 = vpop.f32.mrb[0].mxu0
    %v170 = vadd.f32 %v94, %v169
    %v171 = vpop.f32.mrb[0].mxu0
    %172 = vmatprep.mubr.f32.mxu0 0.0
    %173 = vmatmul.mubr.f32.gmra.mrb[0].mxu0 %v101
    %v174 = vpop.f32.mrb[0].mxu0
    %v175 = vadd.f32 %v94, %v174
    %v176 = vpop.f32.mrb[0].mxu0
    %177 = vdwg.mxu0
    %v178 = vmul.f32 %v170, 0.5
    %v179 = vmul.f32 %v175, 0.5
    %v180 = vmul.f32 %v170, 0.70710677
    %v181 = vmul.f32 %v175, 0.70710677
    %v182 = verf.f32.pop %v180
    %v183 = verf.f32.pop %v181
    %v184 = vadd.f32 %v182, 1.0
    %v185 = vadd.f32 %v183, 1.0
    %v186 = vmul.f32 %v178, %v184
    %v187 = vmul.f32 %v179, %v185
    %v188 = vld [vmem:[#allocation3] sm:$0xff]
    %v189 = vld [vmem:[#allocation3 + $0x8] sm:$0xff]
    %v190 = vld [vmem:[%s5] sm:$0xff]
    %v191 = vld [vmem:[%s5 + $0x8] sm:$0xff]
    %v192 = vld [vmem:[%s5 + $0x10] sm:$0xff]
    %v193 = vld [vmem:[%s5 + $0x18] sm:$0xff]
    %v194 = vld [vmem:[%s5 + $0x20] sm:$0xff]
    %v195 = vld [vmem:[%s5 + $0x28] sm:$0xff]
    %v196 = vld [vmem:[%s5 + $0x30] sm:$0xff]
    %v197 = vld [vmem:[%s5 + $0x38] sm:$0xff]
    %vm198 = vcmask 523264
    %v200 = vsel %vm198, %v186, 0
    %v203 = vsel %vm198, %v187, 0
    %205 = vmatprep.subr.mxu0 0.0
    %206 = vmatpush1.msra.mxu0 %v190
    %207 = vmatprep.subr.mxu0 0.0
    %208 = vmatpush1.msra.mxu0 %v191
    %209 = vmatprep.subr.mxu0 0.0
    %210 = vmatpush1.msra.mxu0 %v192
    %211 = vmatprep.subr.mxu0 0.0
    %212 = vmatpush1.msra.mxu0 %v193
    %213 = vmatprep.subr.mxu0 0.0
    %214 = vmatpush1.msra.mxu0 %v194
    %215 = vmatprep.subr.mxu0 0.0
    %216 = vmatpush1.msra.mxu0 %v195
    %217 = vmatprep.subr.mxu0 0.0
    %218 = vmatpush1.msra.mxu0 %v196
    %219 = vmatprep.subr.mxu0 0.0
    %220 = vmatpush1.msra.mxu0 %v197
    %221 = vmatprep.subr.mxu0 0.0
    %222 = vmatpush1.msra.mxu0 0.0
    %223 = vmatprep.subr.mxu0 0.0
    %224 = vmatpush1.msra.mxu0 0.0
    %225 = vmatprep.subr.mxu0 0.0
    %226 = vmatpush1.msra.mxu0 0.0
    %227 = vmatprep.subr.mxu0 0.0
    %228 = vmatpush1.msra.mxu0 0.0
    %229 = vmatprep.subr.mxu0 0.0
    %230 = vmatpush1.msra.mxu0 0.0
    %231 = vmatprep.subr.mxu0 0.0
    %232 = vmatpush1.msra.mxu0 0.0
    %233 = vmatprep.subr.mxu0 0.0
    %234 = vmatpush1.msra.mxu0 0.0
    %235 = vmatprep.subr.mxu0 0.0
    %236 = vmatpush1.msra.mxu0 0.0
    %237 = vmatprep.subr.mxu0 0.0
    %238 = vmatpush1.msra.mxu0 0.0
    %239 = vmatprep.subr.mxu0 0.0
    %240 = vmatpush1.msra.mxu0 0.0
    %241 = vmatprep.subr.mxu0 0.0
    %242 = vmatpush1.msra.mxu0 0.0
    %243 = vmatprep.subr.mxu0 0.0
    %244 = vmatpush1.msra.mxu0 0.0
    %245 = vmatprep.subr.mxu0 0.0
    %246 = vmatpush1.msra.mxu0 0.0
    %247 = vmatprep.subr.mxu0 0.0
    %248 = vmatpush1.msra.mxu0 0.0
    %249 = vmatprep.subr.mxu0 0.0
    %250 = vmatpush1.msra.mxu0 0.0
    %251 = vmatprep.subr.mxu0 0.0
    %252 = vmatpush1.msra.mxu0 0.0
    %253 = vmatprep.subr.mxu0 0.0
    %254 = vmatpush1.msra.mxu0 0.0
    %255 = vmatprep.subr.mxu0 0.0
    %256 = vmatpush1.msra.mxu0 0.0
    %257 = vmatprep.subr.mxu0 0.0
    %258 = vmatpush1.msra.mxu0 0.0
    %259 = vmatprep.subr.mxu0 0.0
    %260 = vmatpush1.msra.mxu0 0.0
    %261 = vmatprep.subr.mxu0 0.0
    %262 = vmatpush1.msra.mxu0 0.0
    %263 = vmatprep.subr.mxu0 0.0
    %264 = vmatpush1.msra.mxu0 0.0
    %265 = vmatprep.subr.mxu0 0.0
    %266 = vmatpush1.msra.mxu0 0.0
    %267 = vmatprep.subr.mxu0 0.0
    %268 = vmatpush1.msra.mxu0 0.0
    %269 = vmatprep.mubr.f32.mxu0 0.0
    %270 = vmatmul.mubr.f32.gmra.mrb[0].mxu0 %v200
    %v271 = vpop.f32.mrb[0].mxu0
    %v272 = vadd.f32 0.0, %v271
    %v273 = vpop.f32.mrb[0].mxu0
    %274 = vmatprep.mubr.f32.mxu0 0.0
    %275 = vmatmul.mubr.f32.gmra.mrb[0].mxu0 %v203
    %v276 = vpop.f32.mrb[0].mxu0
    %v277 = vadd.f32 0.0, %v276
    %v278 = vpop.f32.mrb[0].mxu0
    %279 = vdwg.mxu0
    %v280 = vadd.f32 %v188, %v272
    %v281 = vadd.f32 %v189, %v277
    %282 = vst.msk [vmem:[#allocation3] sm:$0xff] %vm96, %v280
    %283 = vst.msk [vmem:[#allocation3 + $0x8] sm:$0xff] %vm96, %v281
    // Predicated region
    $region34: #{tpu_custom_call.1} parent=1 // pred_check
      %p284 = pneg %p27
    $region35: #{tpu_custom_call.1} parent=1 // pred_check_branch
      %286 = sbr.rel (%p284) target = $region37
    $region36: #{tpu_custom_call.1} parent=1 // pred_region
      %v287 = vld [vmem:[#allocation3] sm:$0xff]
      %v288 = vld [vmem:[#allocation3 + $0x8] sm:$0xff]
      %v289 = vld [vmem:[%s6] sm:$0x1]
      %v291 = vlaneseq
      %v292 = vshrl.u32 %v291, 7
      %v293 = vsub.s32 0, %v292
      %v294 = vrot.slane %v289, %v293
      %v296 = vadd.f32 %v287, %v294
      %v297 = vadd.f32 %v288, %v294
      %298 = vst.msk [vmem:[#allocation4] sm:$0xff] %vm96, %v296
      %299 = vst.msk [vmem:[#allocation4 + $0x8] sm:$0xff] %vm96, %v297
    $region37: #{tpu_custom_call.1} parent=1 // pred_fallthru
      _
    // Predicated region
    $region38: #{tpu_custom_call.1} parent=1 // pred_check
      _
    $region39: #{tpu_custom_call.1} parent=1 // pred_check_branch
      %301 = sbr.rel (0) target = $region41
    $region40: #{tpu_custom_call.1} parent=1 // pred_region
      %s303 = ssub.s32 256, 256
      %304 = vsyncadd [#allocation5], %s303
      %s305 = sshll.u32 [#allocation4], 4
      %s306 = int_to_ptr.vmem [resolvable:$true] %s305
      %311 = dma.vmem_to_hbm [thread:$0]  %s306, 256, %s7, [#allocation5], 128, 128, 8
    $region41: #{tpu_custom_call.1} parent=1 // pred_fallthru
      _
    // Predicated region
    $region42: #{tpu_custom_call.1} parent=1 // pred_check
      _
    $region43: #{tpu_custom_call.1} parent=1 // pred_check_branch
      %313 = sbr.rel (0) target = $region45
    $region44: #{tpu_custom_call.1} parent=1 // pred_region
      %314 = dma.done [#allocation5], 256
    $region45: #{tpu_custom_call.1} parent=1 // pred_fallthru
      _
    %315 = vsyncpa [#allocation5], 1

</llo_original>
